<compile_context>
chip_gen: v6e
topology: v6e:2x2x1
jax: 0.10.0
libtpu: 0.0.40
codegen_flags: <defaults>
</compile_context>

<pallas_src>
import jax
import jax.numpy as jnp
from jax.experimental import pallas as pl
from jax.experimental.pallas import tpu as pltpu


def _param_model_kernel(x_ref, w1_ref, b1_ref, w2_ref, b2_ref, o_ref):
    # ---- Linear 1 + Sigmoid -------------------------------------------------
    # (TM, C) @ (C, H) on the MXU, f32 accumulation; exp rides the EUP slot.
    h = jnp.dot(x_ref[...], w1_ref[...], preferred_element_type=jnp.float32)
    h = jax.nn.sigmoid(h + b1_ref[...].astype(jnp.float32))

    # ---- Linear 2 -----------------------------------------------------------
    # Tiny (depth = hidden_size) contraction, but the MXU is otherwise idle:
    # one matmul per 8-row group keeps the VALU / vector-store slots free.
    y = jnp.dot(h.astype(w2_ref.dtype), w2_ref[...],
                preferred_element_type=jnp.float32)
    y = y + b2_ref[...].astype(jnp.float32)

    # torch.cat([y[:, :K], y[:, K:2K], y[:, 2K:]], dim=1) is an identity op.
    o_ref[...] = y.astype(o_ref.dtype)


def _round_up(n, m):
    return ((n + m - 1) // m) * m


def parameter_model_nn(x, w1, b1, w2, b2, *, block_m=4096, input_dtype=None):
    """Pallas forward pass of ParameterModelNN.

    Args:
      x : (B, context_size)
      w1: (context_size, hidden_size)   (torch weight transposed)
      b1: (1, hidden_size)
      w2: (hidden_size, 3*K)            (torch weight transposed)
      b2: (1, 3*K)
      block_m: max batch rows per grid step.
      input_dtype: optional narrower dtype (e.g. jnp.bfloat16) for x/w1/w2 to
        halve input HBM traffic; accumulation stays f32 and the output keeps
        x's original dtype.
    Returns:
      (B, 3*K) in x's original dtype.
    """
    B, C = x.shape
    H = w1.shape[1]
    out_dim = w2.shape[1]
    out_dtype = x.dtype

    if input_dtype is not None:
        x = x.astype(input_dtype)
        w1 = w1.astype(input_dtype)
        w2 = w2.astype(input_dtype)
    b1 = b1.astype(jnp.float32)
    b2 = b2.astype(jnp.float32)

    # --- Batch tile choice ---------------------------------------------------
    # Big enough to amortize per-step pipeline overhead, but keep >=2 grid
    # steps when B allows it so both v7x TensorCores get work.  Rows are
    # independent, so a ragged tail block is handled by Pallas edge-block
    # semantics (no wrapper-side padding of x needed).
    if B <= 8:
        tm = B                                   # full-dim block (rule-exempt)
    else:
        tm = min(block_m, _round_up(pl.cdiv(B, 2), 8))
    grid = (pl.cdiv(B, tm),)

    out = pl.pallas_call(
        _param_model_kernel,
        out_shape=jax.ShapeDtypeStruct((B, out_dim), out_dtype),
        grid=grid,
        in_specs=[
            pl.BlockSpec((tm, C), lambda i: (i, 0)),        # x: tiled on batch
            pl.BlockSpec((C, H), lambda i: (0, 0)),         # w1: VMEM-resident
            pl.BlockSpec((1, H), lambda i: (0, 0)),         # b1: VMEM-resident
            pl.BlockSpec((H, out_dim), lambda i: (0, 0)),   # w2 (unpadded)
            pl.BlockSpec((1, out_dim), lambda i: (0, 0)),   # b2 (unpadded)
        ],
        out_specs=pl.BlockSpec((tm, out_dim), lambda i: (i, 0)),
        compiler_params=pltpu.CompilerParams(
            dimension_semantics=("parallel",),              # megacore-friendly
            vmem_limit_bytes=32 * 1024 * 1024,              # narrow lanes pad to 128 in VMEM
        ),
    )(x, w1, b1, w2, b2)

    return out


def _reference(x, w1, b1, w2, b2):
    h = jax.nn.sigmoid(x @ w1 + b1)
    return h @ w2 + b2


if __name__ == "__main__":
    # Small shapes consistent with the module:
    #   context_size=32, K=4, hidden_size=3 (default), batch=8
    context_size, K, hidden_size, batch = 32, 4, 3, 8
    out_dim = 3 * K

    key = jax.random.PRNGKey(0)
    kx, k1, k2, k3, k4 = jax.random.split(key, 5)

    x = jax.random.normal(kx, (batch, context_size), dtype=jnp.float32)

    # Deterministic parameter init (synthetic; matches nn.Linear shapes,
    # stored transposed as (in, out) for the kernel).
    w1 = jax.random.normal(k1, (context_size, hidden_size), dtype=jnp.float32) * 0.1
    b1 = jax.random.normal(k2, (1, hidden_size), dtype=jnp.float32) * 0.1
    w2 = jax.random.normal(k3, (hidden_size, out_dim), dtype=jnp.float32) * 0.1
    b2 = jax.random.normal(k4, (1, out_dim), dtype=jnp.float32) * 0.1

    y = parameter_model_nn(x, w1, b1, w2, b2)
    y = jax.block_until_ready(y)

    y_ref = _reference(x, w1, b1, w2, b2)
    assert y.shape == (batch, out_dim), y.shape
    assert jnp.allclose(y, y_ref, atol=1e-5, rtol=1e-5), "mismatch vs reference"

    print("KERNEL_OK")
</pallas_src>

<mosaic_0001>
module attributes {stable_mosaic.version = 11 : i64} {
  func.func @_param_model_kernel(%arg0: i32, %arg1: memref<8x32xf32, #tpu.memory_space<vmem>>, %arg2: memref<32x3xf32, #tpu.memory_space<vmem>>, %arg3: memref<1x3xf32, #tpu.memory_space<vmem>>, %arg4: memref<3x12xf32, #tpu.memory_space<vmem>>, %arg5: memref<1x12xf32, #tpu.memory_space<vmem>>, %arg6: memref<8x12xf32, #tpu.memory_space<vmem>>) attributes {dimension_semantics = [#tpu.dimension_semantics<parallel>], iteration_bounds = array<i64: 1>, scalar_prefetch = 0 : i64, scratch_operands = 0 : i64, tpu.core_type = #tpu.core_type<tc>, window_params = [{transform_indices = @transform_0, window_bounds = array<i64: 8, 32>}, {pipeline_mode = #tpu.pipeline_mode<synchronous>, transform_indices = @transform_1, window_bounds = array<i64: 32, 3>}, {pipeline_mode = #tpu.pipeline_mode<synchronous>, transform_indices = @transform_2, window_bounds = array<i64: 1, 3>}, {pipeline_mode = #tpu.pipeline_mode<synchronous>, transform_indices = @transform_3, window_bounds = array<i64: 3, 12>}, {pipeline_mode = #tpu.pipeline_mode<synchronous>, transform_indices = @transform_4, window_bounds = array<i64: 1, 12>}, {transform_indices = @transform_5, window_bounds = array<i64: 8, 12>}]} {
    %c0 = arith.constant 0 : index
    %c0_0 = arith.constant 0 : index
    %0 = vector.load %arg1[%c0, %c0_0] : memref<8x32xf32, #tpu.memory_space<vmem>>, vector<8x32xf32>
    %c0_1 = arith.constant 0 : index
    %c0_2 = arith.constant 0 : index
    %1 = vector.load %arg2[%c0_1, %c0_2] : memref<32x3xf32, #tpu.memory_space<vmem>>, vector<32x3xf32>
    %cst = arith.constant dense<0.000000e+00> : vector<8x3xf32>
    %2 = tpu.matmul %0, %1, %cst {dimension_numbers = #tpu.dot_dimension_numbers<[1], [0], [0], [1], [0, 0, 1, 1], [], []>} : vector<8x32xf32>, vector<32x3xf32>, vector<8x3xf32> -> vector<8x3xf32>
    %c0_3 = arith.constant 0 : index
    %c0_4 = arith.constant 0 : index
    %3 = vector.load %arg3[%c0_3, %c0_4] : memref<1x3xf32, #tpu.memory_space<vmem>>, vector<1x3xf32>
    %4 = vector.broadcast %3 : vector<1x3xf32> to vector<8x3xf32>
    %5 = arith.addf %2, %4 : vector<8x3xf32>
    %6 = arith.negf %5 : vector<8x3xf32>
    %7 = math.exp %6 : vector<8x3xf32>
    %cst_5 = arith.constant 1.000000e+00 : f32
    %8 = vector.broadcast %cst_5 : f32 to vector<8x3xf32>
    %9 = arith.addf %8, %7 : vector<8x3xf32>
    %10 = arith.divf %8, %9 : vector<8x3xf32>
    %c0_6 = arith.constant 0 : index
    %c0_7 = arith.constant 0 : index
    %11 = vector.load %arg4[%c0_6, %c0_7] : memref<3x12xf32, #tpu.memory_space<vmem>>, vector<3x12xf32>
    %cst_8 = arith.constant dense<0.000000e+00> : vector<8x12xf32>
    %12 = tpu.matmul %10, %11, %cst_8 {dimension_numbers = #tpu.dot_dimension_numbers<[1], [0], [0], [1], [0, 0, 1, 1], [], []>} : vector<8x3xf32>, vector<3x12xf32>, vector<8x12xf32> -> vector<8x12xf32>
    %c0_9 = arith.constant 0 : index
    %c0_10 = arith.constant 0 : index
    %13 = vector.load %arg5[%c0_9, %c0_10] : memref<1x12xf32, #tpu.memory_space<vmem>>, vector<1x12xf32>
    %14 = vector.broadcast %13 : vector<1x12xf32> to vector<8x12xf32>
    %15 = arith.addf %12, %14 : vector<8x12xf32>
    %c0_11 = arith.constant 0 : index
    %c0_12 = arith.constant 0 : index
    %16 = vector.load %arg6[%c0_11, %c0_12] : memref<8x12xf32, #tpu.memory_space<vmem>>, vector<8x12xf32>
    tpu.vector_store %arg6[%c0_11, %c0_12], %15 {strides = array<i32>} : memref<8x12xf32, #tpu.memory_space<vmem>>, vector<8x12xf32>,
    return
  }
  func.func @transform_0(%arg0: i32) -> (i32, i32) {
    %c0_i32 = arith.constant 0 : i32
    %c0_i32_0 = arith.constant 0 : i32
    return %arg0, %c0_i32 : i32, i32
  }
  func.func @transform_1(%arg0: i32) -> (i32, i32) {
    %c0_i32 = arith.constant 0 : i32
    %c0_i32_0 = arith.constant 0 : i32
    %c0_i32_1 = arith.constant 0 : i32
    return %c0_i32, %c0_i32_0 : i32, i32
  }
  func.func @transform_2(%arg0: i32) -> (i32, i32) {
    %c0_i32 = arith.constant 0 : i32
    %c0_i32_0 = arith.constant 0 : i32
    %c0_i32_1 = arith.constant 0 : i32
    return %c0_i32, %c0_i32_0 : i32, i32
  }
  func.func @transform_3(%arg0: i32) -> (i32, i32) {
    %c0_i32 = arith.constant 0 : i32
    %c0_i32_0 = arith.constant 0 : i32
    %c0_i32_1 = arith.constant 0 : i32
    return %c0_i32, %c0_i32_0 : i32, i32
  }
  func.func @transform_4(%arg0: i32) -> (i32, i32) {
    %c0_i32 = arith.constant 0 : i32
    %c0_i32_0 = arith.constant 0 : i32
    %c0_i32_1 = arith.constant 0 : i32
    return %c0_i32, %c0_i32_0 : i32, i32
  }
  func.func @transform_5(%arg0: i32) -> (i32, i32) {
    %c0_i32 = arith.constant 0 : i32
    %c0_i32_0 = arith.constant 0 : i32
    return %arg0, %c0_i32 : i32, i32
  }
}

</mosaic_0001>

<llo_original>
// kernel: tpu_custom_call.1
$region0: #{tpu_custom_call.1}
  #allocation0 [shape = 'u32[]', space=smem, size = 0x4, offset = 0x4, fixed_abs, tag = 'smem constant byte address 0x4 - core index']
  #allocation1 [shape = 'u32[144,128]{1,0:T(1,128)}', space=vmem, size = 0x12000, scoped, tag = 'internal scratch']
  %s0 = inlined_call_operand.vmem [shape: f32[8,32], index: 0, kind: input, shape index: {}]
  %s1 = inlined_call_operand.vmem [shape: f32[32,3], index: 1, kind: input, shape index: {}]
  %s2 = inlined_call_operand.vmem [shape: f32[1,3], index: 2, kind: input, shape index: {}]
  %s3 = inlined_call_operand.vmem [shape: f32[3,12], index: 3, kind: input, shape index: {}]
  %s4 = inlined_call_operand.vmem [shape: f32[1,12], index: 4, kind: input, shape index: {}]
  %s5 = inlined_call_operand.hbm [shape: f32[8,12], index: 5, kind: output, shape index: {}]
  %s6 = sld [smem:[#allocation0]]
  $region30: #{tpu_custom_call.1} parent=0
    _
  %s8 = ssub.s32 1, %s6
  %s9 = scalar_select 0, %s8, %s6
  $region1: #{tpu_custom_call.1} parent=0
    #allocation2 [shape = 'u8[4096]{0}', space=vmem, size = 0x1000, scoped, tag = 'output window, operand 0, single buffered']
    #allocation3 [shape = 's32[1]{0}', space=sflag, size = 0x4, scoped, tag = 'scoped memory for tpu_custom_call.1']
    %10 = vsyncpa [#allocation3], 0
    // Predicated region
    $region2: #{tpu_custom_call.1} parent=1 // pred_check
      _
    $region3: #{tpu_custom_call.1} parent=1 // pred_check_branch
      %12 = sbr.rel (0) target = $region5
    $region4: #{tpu_custom_call.1} parent=1 // pred_region
      _
    $region5: #{tpu_custom_call.1} parent=1 // pred_fallthru
      _
    // Predicated region
    $region6: #{tpu_custom_call.1} parent=1 // pred_check
      _
    $region7: #{tpu_custom_call.1} parent=1 // pred_check_branch
      %14 = sbr.rel (0) target = $region9
    $region8: #{tpu_custom_call.1} parent=1 // pred_region
      _
    $region9: #{tpu_custom_call.1} parent=1 // pred_fallthru
      _
    // Predicated region
    $region10: #{tpu_custom_call.1} parent=1 // pred_check
      _
    $region11: #{tpu_custom_call.1} parent=1 // pred_check_branch
      %16 = sbr.rel (0) target = $region13
    $region12: #{tpu_custom_call.1} parent=1 // pred_region
      _
    $region13: #{tpu_custom_call.1} parent=1 // pred_fallthru
      _
    // Predicated region
    $region14: #{tpu_custom_call.1} parent=1 // pred_check
      _
    $region15: #{tpu_custom_call.1} parent=1 // pred_check_branch
      %18 = sbr.rel (0) target = $region17
    $region16: #{tpu_custom_call.1} parent=1 // pred_region
      _
    $region17: #{tpu_custom_call.1} parent=1 // pred_fallthru
      _
    // Predicated region
    $region18: #{tpu_custom_call.1} parent=1 // pred_check
      _
    $region19: #{tpu_custom_call.1} parent=1 // pred_check_branch
      %20 = sbr.rel (0) target = $region21
    $region20: #{tpu_custom_call.1} parent=1 // pred_region
      _
    $region21: #{tpu_custom_call.1} parent=1 // pred_fallthru
      _
    %v21 = vld [vmem:[%s0] sm:$0xff]
    %v22 = vld [vmem:[%s1] sm:$0xff]
    %v23 = vld [vmem:[%s1 + $0x8] sm:$0xff]
    %v24 = vld [vmem:[%s1 + $0x10] sm:$0xff]
    %v25 = vld [vmem:[%s1 + $0x18] sm:$0xff]
    %v26 = vld [vmem:[%s2] sm:$0x1]
    %v28 = vlaneseq
    %v29 = vshrl.u32 %v28, 7
    %v30 = vsub.s32 0, %v29
    %v31 = vrot.slane %v26, %v30
    %vm33 = vcmask 261120
    %v35 = vsel %vm33, %v21, 0
    %37 = vmatprep.subr.mxu0 0.0
    %38 = vmatpush1.msra.mxu0 0.0
    %39 = vmatprep.subr.mxu0 0.0
    %40 = vmatpush1.msra.mxu0 0.0
    %41 = vmatprep.subr.mxu0 0.0
    %42 = vmatpush1.msra.mxu0 0.0
    %43 = vmatprep.subr.mxu0 0.0
    %44 = vmatpush1.msra.mxu0 0.0
    %45 = vmatprep.subr.mxu0 0.0
    %46 = vmatpush1.msra.mxu0 0.0
    %47 = vmatprep.subr.mxu0 0.0
    %48 = vmatpush1.msra.mxu0 0.0
    %49 = vmatprep.subr.mxu0 0.0
    %50 = vmatpush1.msra.mxu0 0.0
    %51 = vmatprep.subr.mxu0 0.0
    %52 = vmatpush1.msra.mxu0 0.0
    %53 = vmatprep.subr.mxu0 0.0
    %54 = vmatpush1.msra.mxu0 0.0
    %55 = vmatprep.subr.mxu0 0.0
    %56 = vmatpush1.msra.mxu0 0.0
    %57 = vmatprep.subr.mxu0 0.0
    %58 = vmatpush1.msra.mxu0 0.0
    %59 = vmatprep.subr.mxu0 0.0
    %60 = vmatpush1.msra.mxu0 0.0
    %61 = vmatprep.subr.mxu0 0.0
    %62 = vmatpush1.msra.mxu0 %v25
    %63 = vmatprep.subr.mxu0 0.0
    %64 = vmatpush1.msra.mxu0 %v24
    %65 = vmatprep.subr.mxu0 0.0
    %66 = vmatpush1.msra.mxu0 %v23
    %67 = vmatprep.subr.mxu0 0.0
    %68 = vmatpush1.msra.mxu0 %v22
    %69 = vmatprep.subr.mxu0 0.0
    %70 = vmatpush2.msra.mxu0 0.0
    %71 = vmatprep.subr.mxu0 0.0
    %72 = vmatpush2.msra.mxu0 0.0
    %73 = vmatprep.subr.mxu0 0.0
    %74 = vmatpush2.msra.mxu0 0.0
    %75 = vmatprep.subr.mxu0 0.0
    %76 = vmatpush2.msra.mxu0 0.0
    %77 = vmatprep.subr.mxu0 0.0
    %78 = vmatpush2.msra.mxu0 0.0
    %79 = vmatprep.subr.mxu0 0.0
    %80 = vmatpush2.msra.mxu0 0.0
    %81 = vmatprep.subr.mxu0 0.0
    %82 = vmatpush2.msra.mxu0 0.0
    %83 = vmatprep.subr.mxu0 0.0
    %84 = vmatpush2.msra.mxu0 0.0
    %85 = vmatprep.subr.mxu0 0.0
    %86 = vmatpush2.msra.mxu0 0.0
    %87 = vmatprep.subr.mxu0 0.0
    %88 = vmatpush2.msra.mxu0 0.0
    %89 = vmatprep.subr.mxu0 0.0
    %90 = vmatpush2.msra.mxu0 0.0
    %91 = vmatprep.subr.mxu0 0.0
    %92 = vmatpush2.msra.mxu0 0.0
    %93 = vmatprep.subr.mxu0 0.0
    %94 = vmatpush2.msra.mxu0 0.0
    %95 = vmatprep.subr.mxu0 0.0
    %96 = vmatpush2.msra.mxu0 0.0
    %97 = vmatprep.subr.mxu0 0.0
    %98 = vmatpush2.msra.mxu0 0.0
    %99 = vmatprep.subr.mxu0 0.0
    %100 = vmatpush2.msra.mxu0 0.0
    %101 = vmatprep.mubr.f32.mxu0 0.0
    %102 = vmatmul.mubr.f32.gmra.mxu0 %v35
    %v103 = vpop.f32.mrf.mxu0
    %v104 = vadd.f32 %v31, %v103
    %v105 = vpop.f32.mrf.mxu0
    %106 = vdwg.mxu0
    %v107 = vxor.u32 %v104, 2147483648
    %v108 = vmul.f32 %v107, 1.442695
    %v109 = vpow.pop %v108
    %v110 = vadd.f32 %v109, 1.0
    %v111 = vrcp.pop %v110
    %v112 = vmul.f32 1.0, %v111
    %v113 = vld [vmem:[%s3] sm:$0x7]
    %v114 = vld [vmem:[%s4] sm:$0x1]
    %v116 = vlaneseq
    %v117 = vshrl.u32 %v116, 7
    %v118 = vsub.s32 0, %v117
    %v119 = vrot.slane %v114, %v118
    %vm121 = vcmask 23552
    %v123 = vsel %vm121, %v112, 0
    %vm125 = vcmask 1042432
    %v127 = vsel %vm125, %v113, 0
    %129 = vmatprep.subr.mxu0 0.0
    %130 = vmatpush1.msra.mxu0 0.0
    %131 = vmatprep.subr.mxu0 0.0
    %132 = vmatpush1.msra.mxu0 0.0
    %133 = vmatprep.subr.mxu0 0.0
    %134 = vmatpush1.msra.mxu0 0.0
    %135 = vmatprep.subr.mxu0 0.0
    %136 = vmatpush1.msra.mxu0 0.0
    %137 = vmatprep.subr.mxu0 0.0
    %138 = vmatpush1.msra.mxu0 0.0
    %139 = vmatprep.subr.mxu0 0.0
    %140 = vmatpush1.msra.mxu0 0.0
    %141 = vmatprep.subr.mxu0 0.0
    %142 = vmatpush1.msra.mxu0 0.0
    %143 = vmatprep.subr.mxu0 0.0
    %144 = vmatpush1.msra.mxu0 0.0
    %145 = vmatprep.subr.mxu0 0.0
    %146 = vmatpush1.msra.mxu0 0.0
    %147 = vmatprep.subr.mxu0 0.0
    %148 = vmatpush1.msra.mxu0 0.0
    %149 = vmatprep.subr.mxu0 0.0
    %150 = vmatpush1.msra.mxu0 0.0
    %151 = vmatprep.subr.mxu0 0.0
    %152 = vmatpush1.msra.mxu0 0.0
    %153 = vmatprep.subr.mxu0 0.0
    %154 = vmatpush1.msra.mxu0 0.0
    %155 = vmatprep.subr.mxu0 0.0
    %156 = vmatpush1.msra.mxu0 0.0
    %157 = vmatprep.subr.mxu0 0.0
    %158 = vmatpush1.msra.mxu0 0.0
    %159 = vmatprep.subr.mxu0 0.0
    %160 = vmatpush1.msra.mxu0 %v127
    %161 = vmatprep.subr.mxu0 0.0
    %162 = vmatpush2.msra.mxu0 0.0
    %163 = vmatprep.subr.mxu0 0.0
    %164 = vmatpush2.msra.mxu0 0.0
    %165 = vmatprep.subr.mxu0 0.0
    %166 = vmatpush2.msra.mxu0 0.0
    %167 = vmatprep.subr.mxu0 0.0
    %168 = vmatpush2.msra.mxu0 0.0
    %169 = vmatprep.subr.mxu0 0.0
    %170 = vmatpush2.msra.mxu0 0.0
    %171 = vmatprep.subr.mxu0 0.0
    %172 = vmatpush2.msra.mxu0 0.0
    %173 = vmatprep.subr.mxu0 0.0
    %174 = vmatpush2.msra.mxu0 0.0
    %175 = vmatprep.subr.mxu0 0.0
    %176 = vmatpush2.msra.mxu0 0.0
    %177 = vmatprep.subr.mxu0 0.0
    %178 = vmatpush2.msra.mxu0 0.0
    %179 = vmatprep.subr.mxu0 0.0
    %180 = vmatpush2.msra.mxu0 0.0
    %181 = vmatprep.subr.mxu0 0.0
    %182 = vmatpush2.msra.mxu0 0.0
    %183 = vmatprep.subr.mxu0 0.0
    %184 = vmatpush2.msra.mxu0 0.0
    %185 = vmatprep.subr.mxu0 0.0
    %186 = vmatpush2.msra.mxu0 0.0
    %187 = vmatprep.subr.mxu0 0.0
    %188 = vmatpush2.msra.mxu0 0.0
    %189 = vmatprep.subr.mxu0 0.0
    %190 = vmatpush2.msra.mxu0 0.0
    %191 = vmatprep.subr.mxu0 0.0
    %192 = vmatpush2.msra.mxu0 0.0
    %193 = vmatprep.mubr.f32.mxu0 0.0
    %194 = vmatmul.mubr.f32.gmra.mxu0 %v123
    %v195 = vpop.f32.mrf.mxu0
    %v196 = vadd.f32 %v119, %v195
    %v197 = vpop.f32.mrf.mxu0
    %198 = vdwg.mxu0
    %vm199 = vcmask 97280
    %200 = vst.msk [vmem:[#allocation2] sm:$0xff] %vm199, %v196
    // Predicated region
    $region22: #{tpu_custom_call.1} parent=1 // pred_check
      _
    $region23: #{tpu_custom_call.1} parent=1 // pred_check_branch
      %202 = sbr.rel (0) target = $region25
    $region24: #{tpu_custom_call.1} parent=1 // pred_region
      %s204 = ssub.s32 128, 128
      %205 = vsyncadd [#allocation3], %s204
      %s207 = sshll.u32 [#allocation2], 4
      %s208 = int_to_ptr.vmem [resolvable:$true] %s207
      %210 = dma.vmem_to_hbm [thread:$0]  %s208, 128, %s5, [#allocation3]
    $region25: #{tpu_custom_call.1} parent=1 // pred_fallthru
      _
    // Predicated region
    $region26: #{tpu_custom_call.1} parent=1 // pred_check
      _
    $region27: #{tpu_custom_call.1} parent=1 // pred_check_branch
      %212 = sbr.rel (0) target = $region29
    $region28: #{tpu_custom_call.1} parent=1 // pred_region
      %213 = dma.done [#allocation3], 128
    $region29: #{tpu_custom_call.1} parent=1 // pred_fallthru
      _
    %214 = vsyncpa [#allocation3], 1

</llo_original>
